<compile_context>
chip_gen: v7x
topology: tpu7x:2x2x1
jax: 0.10.0
libtpu: 0.0.40
codegen_flags: <defaults>
</compile_context>

<pallas_src>
import math

import jax
import jax.numpy as jnp
from jax import lax
from jax.experimental import pallas as pl
from jax.experimental.pallas import tpu as pltpu

_EPS = 1e-12                       # torch.nn.functional.normalize default eps
_FUSE_STEP_BYTES = 6 * 1024 * 1024 # target in+out bytes per grid step (~4-8 MiB)
_MIN_PIPELINE_STEPS = 8            # keep enough steps for double-buffer overlap


def _rmsnorm_kernel(x_ref, g_ref, o_ref):
    # x_ref: (TB, C, TL); g_ref: (1, C, 1) already pre-scaled by sqrt(C), f32.
    x = x_ref[...].astype(jnp.float32)
    gs = g_ref[...]                                        # (1, C, 1)
    sumsq = jnp.sum(x * x, axis=1, keepdims=True)          # (TB, 1, TL)
    # clamp(sumsq, eps^2) + rsqrt == clamp(||x||, eps) then divide; rsqrt runs
    # on the EUP slot, so the per-element epilogue is just two multiplies.
    inv = lax.rsqrt(jnp.maximum(sumsq, _EPS * _EPS))       # (TB, 1, TL)
    o_ref[...] = (x * inv * gs).astype(o_ref.dtype)


def _vmem_est(tb, c, tl, itemsize):
    io = 2 * 2 * tb * c * tl * itemsize   # input + output, double-buffered
    tmp = 2 * tb * c * tl * 4             # in-kernel f32 temporaries
    return io + tmp


def _vmem_budget():
    """Generation-aware (tile budget, vmem_limit cap)."""
    phys = 64 * 1024 * 1024
    try:
        phys = int(getattr(pltpu.get_tpu_info(), "vmem_capacity_bytes", phys))
    except Exception:
        pass
    if phys >= 128 * 1024 * 1024:
        # v5e / v6e: 128 MiB physical VMEM — let tiles grow to multi-MiB.
        return 96 * 1024 * 1024, 100 * 1024 * 1024
    # v7x: 64 MiB physical per TC — never request all of it (Mosaic scratch,
    # pipeline double buffers need headroom).
    return 40 * 1024 * 1024, 52 * 1024 * 1024


def _choose_tiles(B, C, L, itemsize, budget):
    """Pick (TB, TL): lane-dense L tiles within the VMEM budget, then fuse
    batch elements until each grid step moves a few MiB."""

    def fits(tb, tl):
        return _vmem_est(tb, C, tl, itemsize) <= budget

    # --- lane tile ---
    if L <= 128:
        TL = L  # full-extent last dim is allowed by Mosaic for any size.
    else:
        lmax = -(-L // 128) * 128  # no point exceeding ceil(L/128)*128
        TL = 128
        for cand in (2048, 1024, 512, 256):
            if cand <= lmax and fits(1, cand):
                TL = cand
                break
        while TL > 128 and not fits(1, TL):
            TL //= 2
        # Note: for very large C even (1, C, 128) may exceed the budget (first
        # on v7x's 64 MiB VMEM); we accept it and raise vmem_limit below.
        # TODO(synk): tile C on a third 'arbitrary' grid axis with a VMEM
        # sumsq accumulator if a (1, C, 128) tile ever fails to fit VMEM.

    n_l = -(-L // TL)

    # --- batch fusion (any divisor of B, not just powers of two) ---
    TB = 1
    for d in range(2, B + 1):
        if B % d:
            continue
        step_bytes = 2 * d * C * TL * itemsize        # in + out per grid step
        if step_bytes > _FUSE_STEP_BYTES or not fits(d, TL):
            break
        # Don't starve the pipeline once steps are already big enough to hide
        # the fixed per-step overhead.
        if (B // d) * n_l < _MIN_PIPELINE_STEPS and step_bytes > (1 << 20):
            break
        TB = d
    return TB, TL


def rmsnorm(x, g):
    """x: (B, C, L), g: (1, C, 1). Returns F.normalize(x, dim=1) * g * sqrt(C)."""
    B, C, L = x.shape
    itemsize = jnp.dtype(x.dtype).itemsize

    budget, limit_cap = _vmem_budget()
    TB, TL = _choose_tiles(B, C, L, itemsize, budget)
    grid = (B // TB, pl.cdiv(L, TL))

    # Fold sqrt(C) into the gain once (C elements) so the kernel never touches
    # the scale; also pre-cast to f32 so the tiny operand is DMA'd as-is.
    g32 = g.astype(jnp.float32) * float(math.sqrt(C))

    est = _vmem_est(TB, C, TL, itemsize)
    vmem_limit = min(limit_cap, max(32 * 1024 * 1024, est + 8 * 1024 * 1024))
    # Large-C escape hatch: if a single tile needs more than the cap, request
    # what we actually need rather than silently under-provisioning.
    if est + 2 * 1024 * 1024 > vmem_limit:
        vmem_limit = est + 2 * 1024 * 1024

    return pl.pallas_call(
        _rmsnorm_kernel,
        out_shape=jax.ShapeDtypeStruct((B, C, L), x.dtype),
        grid_spec=pltpu.PrefetchScalarGridSpec(
            num_scalar_prefetch=0,
            grid=grid,
            in_specs=[
                pl.BlockSpec((TB, C, TL), lambda b, l: (b, 0, l)),
                pl.BlockSpec((1, C, 1), lambda b, l: (0, 0, 0)),
            ],
            out_specs=pl.BlockSpec((TB, C, TL), lambda b, l: (b, 0, l)),
        ),
        compiler_params=pltpu.CompilerParams(
            # Reduction is per-(b, l) over channels, so both grid axes are
            # independent; lets v7x shard the grid across its 2 TensorCores.
            dimension_semantics=("parallel", "parallel"),
            vmem_limit_bytes=int(vmem_limit),
        ),
    )(x, g32)


def _reference(x, g):
    C = x.shape[1]
    xf = x.astype(jnp.float32)
    norm = jnp.sqrt(jnp.sum(xf * xf, axis=1, keepdims=True))
    return (xf / jnp.maximum(norm, _EPS) * g * math.sqrt(C)).astype(x.dtype)


if __name__ == "__main__":
    key = jax.random.PRNGKey(0)
    k1, k2, k3 = jax.random.split(key, 3)

    # Toy shape from the module: batch=2, dim=8 channels, length=16.
    B, C = 2, 8
    g = jnp.ones((1, C, 1), dtype=jnp.float32)   # nn.Parameter(torch.ones(1, dim, 1))

    cases = [
        jax.random.normal(k1, (B, C, 16), dtype=jnp.float32),    # small L, single full block
        jax.random.normal(k2, (B, C, 384), dtype=jnp.float32),   # lane-tiled, partial edge block
        jax.random.normal(k3, (B, C, 200), dtype=jnp.float32),   # ragged L, no pad/slice round trip
    ]

    for x in cases:
        out = rmsnorm(x, g)
        jax.block_until_ready(out)
        ref = _reference(x, g)
        assert out.shape == x.shape
        assert jnp.allclose(out, ref, atol=1e-5, rtol=1e-5), (
            f"mismatch at shape {x.shape}: max abs err "
            f"{float(jnp.max(jnp.abs(out - ref)))}")

    print("KERNEL_OK")
</pallas_src>

<mosaic_0001>
module attributes {stable_mosaic.version = 11 : i64} {
  func.func @_rmsnorm_kernel(%arg0: i32, %arg1: i32, %arg2: memref<2x8x16xf32, #tpu.memory_space<vmem>>, %arg3: memref<1x8x1xf32, #tpu.memory_space<vmem>>, %arg4: memref<2x8x16xf32, #tpu.memory_space<vmem>>) attributes {dimension_semantics = [#tpu.dimension_semantics<parallel>, #tpu.dimension_semantics<parallel>], iteration_bounds = array<i64: 1, 1>, scalar_prefetch = 0 : i64, scratch_operands = 0 : i64, tpu.core_type = #tpu.core_type<tc>, window_params = [{transform_indices = @transform_0, window_bounds = array<i64: 2, 8, 16>}, {pipeline_mode = #tpu.pipeline_mode<synchronous>, transform_indices = @transform_1, window_bounds = array<i64: 1, 8, 1>}, {transform_indices = @transform_2, window_bounds = array<i64: 2, 8, 16>}]} {
    %c0 = arith.constant 0 : index
    %c0_0 = arith.constant 0 : index
    %c0_1 = arith.constant 0 : index
    %0 = vector.load %arg2[%c0, %c0_0, %c0_1] : memref<2x8x16xf32, #tpu.memory_space<vmem>>, vector<2x8x16xf32>
    %c0_2 = arith.constant 0 : index
    %c0_3 = arith.constant 0 : index
    %c0_4 = arith.constant 0 : index
    %1 = vector.load %arg3[%c0_2, %c0_3, %c0_4] : memref<1x8x1xf32, #tpu.memory_space<vmem>>, vector<1x8x1xf32>
    %2 = arith.mulf %0, %0 : vector<2x8x16xf32>
    %cst = arith.constant dense<0.000000e+00> : vector<2x16xf32>
    %3 = vector.multi_reduction <add>, %2, %cst [1] : vector<2x8x16xf32> to vector<2x16xf32>
    %4 = vector.shape_cast %3 : vector<2x16xf32> to vector<2x1x16xf32>
    %cst_5 = arith.constant 1.000000e-24 : f32
    %5 = vector.broadcast %cst_5 : f32 to vector<2x1x16xf32>
    %6 = arith.maximumf %4, %5 : vector<2x1x16xf32>
    %7 = math.rsqrt %6 : vector<2x1x16xf32>
    %8 = vector.broadcast %7 : vector<2x1x16xf32> to vector<2x8x16xf32>
    %9 = arith.mulf %0, %8 : vector<2x8x16xf32>
    %10 = vector.broadcast %1 : vector<1x8x1xf32> to vector<2x8x16xf32>
    %11 = arith.mulf %9, %10 : vector<2x8x16xf32>
    %c0_6 = arith.constant 0 : index
    %c0_7 = arith.constant 0 : index
    %c0_8 = arith.constant 0 : index
    %12 = vector.load %arg4[%c0_6, %c0_7, %c0_8] : memref<2x8x16xf32, #tpu.memory_space<vmem>>, vector<2x8x16xf32>
    tpu.vector_store %arg4[%c0_6, %c0_7, %c0_8], %11 {strides = array<i32>} : memref<2x8x16xf32, #tpu.memory_space<vmem>>, vector<2x8x16xf32>,
    return
  }
  func.func @transform_0(%arg0: i32, %arg1: i32) -> (i32, i32, i32) {
    %c0_i32 = arith.constant 0 : i32
    %c0_i32_0 = arith.constant 0 : i32
    return %arg0, %c0_i32, %arg1 : i32, i32, i32
  }
  func.func @transform_1(%arg0: i32, %arg1: i32) -> (i32, i32, i32) {
    %c0_i32 = arith.constant 0 : i32
    %c0_i32_0 = arith.constant 0 : i32
    %c0_i32_1 = arith.constant 0 : i32
    %c0_i32_2 = arith.constant 0 : i32
    return %c0_i32, %c0_i32_0, %c0_i32_1 : i32, i32, i32
  }
  func.func @transform_2(%arg0: i32, %arg1: i32) -> (i32, i32, i32) {
    %c0_i32 = arith.constant 0 : i32
    %c0_i32_0 = arith.constant 0 : i32
    return %arg0, %c0_i32, %arg1 : i32, i32, i32
  }
}

</mosaic_0001>

<llo_original>
// kernel: tpu_custom_call.1
$region0: #{tpu_custom_call.1}
  #allocation0 [shape = 'u32[]', space=smem, size = 0x4, offset = 0x4, fixed_abs, tag = 'smem constant byte address 0x4 - core index']
  #allocation1 [shape = 'u32[144,128]{1,0:T(1,128)}', space=vmem, size = 0x12000, scoped, tag = 'internal scratch']
  %s0 = inlined_call_operand.hbm [shape: f32[2,8,16], index: 0, kind: input, shape index: {}]
  %s1 = inlined_call_operand.vmem [shape: f32[1,8,1], index: 1, kind: input, shape index: {}]
  %s2 = inlined_call_operand.hbm [shape: f32[2,8,16], index: 2, kind: output, shape index: {}]
  %s3 = sld [smem:[#allocation0]]
  $region22: #{tpu_custom_call.1} parent=0
    _
  %s5 = ssub.s32 1, %s3
  %s6 = scalar_select 0, %s5, %s3
  $region1: #{tpu_custom_call.1} parent=0
    #allocation2 [shape = 'u8[8192]{0}', space=vmem, size = 0x2000, scoped, tag = 'input window, operand 0, single buffered']
    #allocation3 [shape = 's32[1]{0}', space=sflag, size = 0x4, scoped, tag = 'scoped memory for tpu_custom_call.1']
    #allocation4 [shape = 's32[1]{0}', space=sflag, size = 0x4, scoped, tag = 'scoped memory for tpu_custom_call.1']
    #allocation5 [shape = 'u8[8192]{0}', space=vmem, size = 0x2000, scoped, tag = 'output window, operand 0, single buffered']
    %7 = vsyncpa [#allocation3], 0
    %8 = vsyncpa [#allocation4], 0
    // Predicated region
    $region2: #{tpu_custom_call.1} parent=1 // pred_check
      _
    $region3: #{tpu_custom_call.1} parent=1 // pred_check_branch
      %10 = sbr.rel (0) target = $region5
    $region4: #{tpu_custom_call.1} parent=1 // pred_region
      %s12 = ssub.s32 256, 256
      %13 = vsyncadd [#allocation3], %s12
      %s14 = sshll.u32 [#allocation2], 4
      %s15 = int_to_ptr.vmem [resolvable:$true] %s14
      %20 = dma.hbm_to_vmem [thread:$0]  %s0, 256, %s15, [#allocation3], 128, 128, 8
    $region5: #{tpu_custom_call.1} parent=1 // pred_fallthru
      _
    // Predicated region
    $region6: #{tpu_custom_call.1} parent=1 // pred_check
      _
    $region7: #{tpu_custom_call.1} parent=1 // pred_check_branch
      %22 = sbr.rel (0) target = $region9
    $region8: #{tpu_custom_call.1} parent=1 // pred_region
      _
    $region9: #{tpu_custom_call.1} parent=1 // pred_fallthru
      _
    // Predicated region
    $region10: #{tpu_custom_call.1} parent=1 // pred_check
      _
    $region11: #{tpu_custom_call.1} parent=1 // pred_check_branch
      %24 = sbr.rel (0) target = $region13
    $region12: #{tpu_custom_call.1} parent=1 // pred_region
      %25 = dma.done [#allocation3], 256
    $region13: #{tpu_custom_call.1} parent=1 // pred_fallthru
      _
    %v26 = vld [vmem:[#allocation2] sm:$0xff]
    %v27 = vld [vmem:[#allocation2 + $0x8] sm:$0xff]
    %v28 = vld [vmem:[%s1] sm:$0xff]
    %v29 = vmul.f32 %v26, %v26
    %v30 = vmul.f32 %v27, %v27
    %vm31 = vcmask 130048
    %v32 = vsel %vm31, %v29, 0.0
    %v33 = vrot.slane %v32, 4
    %v34 = vadd.f32 %v32, %v33
    %v35 = vrot.slane %v34, 2
    %v36 = vadd.f32 %v34, %v35
    %v37 = vrot.slane %v36, 1
    %v38 = vadd.f32 %v36, %v37
    %v39 = vsel %vm31, %v30, 0.0
    %v40 = vrot.slane %v39, 4
    %v41 = vadd.f32 %v39, %v40
    %v42 = vrot.slane %v41, 2
    %v43 = vadd.f32 %v41, %v42
    %v44 = vrot.slane %v43, 1
    %v45 = vadd.f32 %v43, %v44
    %v46 = vmax.f32 %v38, 1e-24
    %v47 = vmax.f32 %v45, 1e-24
    %v48 = vrsqrt.pop %v46
    %v49 = vrsqrt.pop %v47
    %v50 = vmul.f32 %v26, %v48
    %v51 = vmul.f32 %v27, %v49
    %53 = vset.pattern.permute.xlu0 0
    %54 = vperm.xlu0 %53, %v28
    %v55 = vpop.permute.xlu0 %54
    %v57 = vmul.f32 %v50, %v55
    %v58 = vmul.f32 %v51, %v55
    %59 = vst.msk [vmem:[#allocation5] sm:$0xff] %vm31, %v57
    %60 = vst.msk [vmem:[#allocation5 + $0x8] sm:$0xff] %vm31, %v58
    // Predicated region
    $region14: #{tpu_custom_call.1} parent=1 // pred_check
      _
    $region15: #{tpu_custom_call.1} parent=1 // pred_check_branch
      %62 = sbr.rel (0) target = $region17
    $region16: #{tpu_custom_call.1} parent=1 // pred_region
      %s64 = ssub.s32 256, 256
      %65 = vsyncadd [#allocation4], %s64
      %s66 = sshll.u32 [#allocation5], 4
      %s67 = int_to_ptr.vmem [resolvable:$true] %s66
      %72 = dma.vmem_to_hbm [thread:$0]  %s67, 256, %s2, [#allocation4], 128, 128, 8
    $region17: #{tpu_custom_call.1} parent=1 // pred_fallthru
      _
    // Predicated region
    $region18: #{tpu_custom_call.1} parent=1 // pred_check
      _
    $region19: #{tpu_custom_call.1} parent=1 // pred_check_branch
      %74 = sbr.rel (0) target = $region21
    $region20: #{tpu_custom_call.1} parent=1 // pred_region
      %75 = dma.done [#allocation4], 256
    $region21: #{tpu_custom_call.1} parent=1 // pred_fallthru
      _
    %76 = vsyncpa [#allocation3], 1
    %77 = vsyncpa [#allocation4], 1

</llo_original>
